<compile_context>
chip_gen: v6e
topology: v6e:2x2x1
jax: 0.10.0
libtpu: 0.0.40
codegen_flags: <defaults>
</compile_context>

<pallas_src>
import functools
import math

import jax
import jax.numpy as jnp
from jax import lax
from jax.experimental import pallas as pl
from jax.experimental.pallas import tpu as pltpu


def _round_up(x, m):
    return ((x + m - 1) // m) * m


def _largest_chunk(n, cap):
    """Largest multiple of 128 that divides n and is <= cap (n is a mult of 128)."""
    c = (min(cap, n) // 128) * 128
    while c > 128:
        if n % c == 0:
            return c
        c -= 128
    return 128


def _pick_tm(R):
    """Row tile: large enough to amortize weight streaming, >=2 tiles when R allows."""
    r16 = _round_up(max(R, 1), 16)
    if r16 <= 16:
        return 16
    if r16 >= 1024:
        return 512
    return min(512, _round_up((r16 + 1) // 2, 16))


# ---------------------------------------------------------------------------
# RoIAlign (torchvision semantics, sampling_ratio=-1, aligned=False) -- JAX glue
# ---------------------------------------------------------------------------
def _bilinear(fm, y, x):
    """fm: (C, H, W); y, x: (PH, PW) float arrays."""
    C, H, W = fm.shape
    # torchvision rejects only y < -1 || y > H (inclusive boundaries are kept).
    valid = (y >= -1.0) & (y <= H) & (x >= -1.0) & (x <= W)
    y = jnp.maximum(y, 0.0)
    x = jnp.maximum(x, 0.0)
    y_low = jnp.floor(y).astype(jnp.int32)
    x_low = jnp.floor(x).astype(jnp.int32)
    y_cond = y_low >= H - 1
    x_cond = x_low >= W - 1
    y_low = jnp.where(y_cond, H - 1, y_low)
    x_low = jnp.where(x_cond, W - 1, x_low)
    y_high = jnp.where(y_cond, H - 1, y_low + 1)
    x_high = jnp.where(x_cond, W - 1, x_low + 1)
    y = jnp.where(y_cond, y_low.astype(y.dtype), y)
    x = jnp.where(x_cond, x_low.astype(x.dtype), x)
    ly = y - y_low
    lx = x - x_low
    hy = 1.0 - ly
    hx = 1.0 - lx
    v1 = fm[:, y_low, x_low]
    v2 = fm[:, y_low, x_high]
    v3 = fm[:, y_high, x_low]
    v4 = fm[:, y_high, x_high]
    out = hy * hx * v1 + hy * lx * v2 + ly * hx * v3 + ly * lx * v4
    return jnp.where(valid, out, 0.0)


def _roi_align_one(fm, box, *, roi_size, spatial_scale, max_grid):
    """fm: (C, H, W); box: (4,) [x1, y1, x2, y2] in image coordinates."""
    x1, y1, x2, y2 = box[0], box[1], box[2], box[3]
    roi_start_w = x1 * spatial_scale
    roi_start_h = y1 * spatial_scale
    roi_w = jnp.maximum(x2 * spatial_scale - roi_start_w, 1.0)
    roi_h = jnp.maximum(y2 * spatial_scale - roi_start_h, 1.0)
    bin_h = roi_h / roi_size
    bin_w = roi_w / roi_size
    grid_h = jnp.ceil(roi_h / roi_size).astype(jnp.int32)   # sampling_ratio = -1
    grid_w = jnp.ceil(roi_w / roi_size).astype(jnp.int32)
    count = jnp.maximum(grid_h * grid_w, 1).astype(jnp.float32)

    ph = jnp.arange(roi_size, dtype=jnp.float32)[:, None]   # (PH, 1)
    pw = jnp.arange(roi_size, dtype=jnp.float32)[None, :]   # (1, PW)
    C = fm.shape[0]

    def body(idx, acc):
        iy = (idx // max_grid).astype(jnp.float32)
        ix = (idx % max_grid).astype(jnp.float32)
        y = roi_start_h + ph * bin_h + (iy + 0.5) * bin_h / grid_h.astype(jnp.float32)
        x = roi_start_w + pw * bin_w + (ix + 0.5) * bin_w / grid_w.astype(jnp.float32)
        y2d = jnp.broadcast_to(y, (roi_size, roi_size))
        x2d = jnp.broadcast_to(x, (roi_size, roi_size))
        vals = _bilinear(fm, y2d, x2d)                       # (C, PH, PW)
        m = ((iy < grid_h) & (ix < grid_w)).astype(jnp.float32)
        return acc + vals * m

    total = lax.fori_loop(0, max_grid * max_grid, body,
                          jnp.zeros((C, roi_size, roi_size), jnp.float32))
    return total / count


def roi_align(feature_map, proposals, *, roi_size, spatial_scale, max_grid):
    """feature_map: (B, C, H, W); proposals: list of (N, 4). Returns (sum N, C, rs, rs)."""
    fn = functools.partial(_roi_align_one, roi_size=roi_size,
                           spatial_scale=spatial_scale, max_grid=max_grid)
    pooled = []
    for b, boxes in enumerate(proposals):
        # Close over this image's feature map: no per-ROI feature-map duplication.
        pooled.append(jax.vmap(fn, in_axes=(None, 0))(feature_map[b], boxes))
    return jnp.concatenate(pooled, axis=0)


# ---------------------------------------------------------------------------
# Hoisted (one-time) weight preparation: pad, cast to bf16, fuse reg|cls head
# ---------------------------------------------------------------------------
def prepare_head_params(params, *, num_classes):
    d_in, hidden = params["w1"].shape
    n_reg = num_classes * 4
    n_cls = num_classes
    n_out = n_reg + n_cls
    cdt = jnp.bfloat16

    tk = min(256, _round_up(d_in, 128))        # MXU depth on v6e/v7x
    Dp = _round_up(d_in, tk)
    Hp = _round_up(hidden, 128)
    Np = _round_up(n_out, 128)
    tj = _largest_chunk(Hp, 512)               # fc2 / head streaming chunk

    w1 = jnp.zeros((Dp, Hp), cdt).at[:d_in, :hidden].set(params["w1"].astype(cdt))
    b1 = jnp.zeros((1, Hp), jnp.float32).at[:, :hidden].set(
        params["b1"].reshape(1, -1).astype(jnp.float32))
    w2 = jnp.zeros((Hp, Hp), cdt).at[:hidden, :hidden].set(params["w2"].astype(cdt))
    b2 = jnp.zeros((1, Hp), jnp.float32).at[:, :hidden].set(
        params["b2"].reshape(1, -1).astype(jnp.float32))
    wh_full = jnp.concatenate([params["w_reg"], params["w_cls"]], axis=1)
    bh_full = jnp.concatenate([params["b_reg"].reshape(1, -1),
                               params["b_cls"].reshape(1, -1)], axis=1)
    wh = jnp.zeros((Hp, Np), cdt).at[:hidden, :n_out].set(wh_full.astype(cdt))
    bh = jnp.zeros((1, Np), jnp.float32).at[:, :n_out].set(bh_full.astype(jnp.float32))

    meta = dict(d_in=d_in, hidden=hidden, n_reg=n_reg, n_cls=n_cls,
                tk=tk, tj=tj, Dp=Dp, Hp=Hp, Np=Np)
    return {"w1": w1, "b1": b1, "w2": w2, "b2": b2, "wh": wh, "bh": bh, "meta": meta}


# ---------------------------------------------------------------------------
# Pallas kernel: phase 1 fc1 K-reduction; phase 2 streamed fc2 -> relu -> heads
# ---------------------------------------------------------------------------
def _rcnn_head_kernel(x_ref, w1_ref, b1_ref, w2_ref, b2_ref, wh_ref, bh_ref,
                      out_ref, acc_ref, h1_ref, *, kt):
    s = pl.program_id(1)

    # ---- Phase 1: fc1 reduction over K tiles (s in [0, kt)) ----
    @pl.when(s == 0)
    def _():
        # Fold the fc1 bias into the accumulator init (no epilogue add).
        acc_ref[...] = jnp.broadcast_to(b1_ref[...], acc_ref.shape)

    @pl.when(s < kt)
    def _():
        acc_ref[...] += jnp.dot(x_ref[...], w1_ref[...],
                                preferred_element_type=jnp.float32)

    @pl.when(s == kt - 1)
    def _():
        h1_ref[...] = jnp.maximum(acc_ref[...], 0.0).astype(h1_ref.dtype)

    # ---- Phase 2: fc2 + ReLU + fused reg|cls head, streamed over Hp chunks ----
    @pl.when(s == kt)
    def _():
        out_ref[...] = jnp.broadcast_to(bh_ref[...], out_ref.shape)

    @pl.when(s >= kt)
    def _():
        h2 = jnp.maximum(
            jnp.dot(h1_ref[...], w2_ref[...],
                    preferred_element_type=jnp.float32) + b2_ref[...], 0.0)
        out_ref[...] += jnp.dot(h2.astype(wh_ref.dtype), wh_ref[...],
                                preferred_element_type=jnp.float32)


def rcnn_heads_pallas(x, prep):
    """x: (R, D_in) pooled + flattened ROIs. prep: output of prepare_head_params."""
    R, D = x.shape
    meta = prep["meta"]
    assert D == meta["d_in"], "flattened ROI width does not match prepared params"
    tk, tj = meta["tk"], meta["tj"]
    Dp, Hp, Np = meta["Dp"], meta["Hp"], meta["Np"]
    n_reg, n_cls = meta["n_reg"], meta["n_cls"]

    tm = _pick_tm(R)
    Rp = _round_up(max(R, 1), tm)
    kt = Dp // tk
    jt = Hp // tj
    grid = (Rp // tm, kt + jt)

    cdt = jnp.bfloat16
    xp = jnp.zeros((Rp, Dp), cdt).at[:R, :D].set(x.astype(cdt))

    # Index maps: clamped so inactive-phase blocks keep a constant index
    # (the pipeliner skips the re-fetch when the block index is unchanged).
    x_map = lambda i, s: (i, jnp.minimum(s, kt - 1))
    w1_map = lambda i, s: (jnp.minimum(s, kt - 1), 0)
    b1_map = lambda i, s: (0, 0)
    w2_map = lambda i, s: (0, jnp.clip(s - kt, 0, jt - 1))
    b2_map = lambda i, s: (0, jnp.clip(s - kt, 0, jt - 1))
    wh_map = lambda i, s: (jnp.clip(s - kt, 0, jt - 1), 0)
    bh_map = lambda i, s: (0, 0)
    out_map = lambda i, s: (i, 0)

    # VMEM budget (double-buffered streamed blocks + scratch + epilogue temps).
    vmem_bytes = int(
        2 * (tm * tk * 2)            # x block
        + 2 * (tk * Hp * 2)          # w1 K-tile
        + 2 * (Hp * tj * 2)          # w2 column chunk
        + 2 * (tj * Np * 2)          # head-weight row chunk
        + 2 * (tm * Np * 4)          # output block
        + 2 * (Hp + tj + Np) * 4     # bias blocks
        + tm * Hp * 4                # fc1 f32 accumulator scratch
        + tm * Hp * 2                # bf16 h1 scratch
        + tm * tj * 6                # epilogue h2 f32 + bf16 temporaries
    )
    try:
        info = pltpu.get_tpu_info()
        vmem_cap = int(getattr(info, "vmem_capacity_bytes", 64 << 20))
    except Exception:  # pragma: no cover - conservative fallback
        vmem_cap = 64 << 20
    vmem_limit = max(int(vmem_bytes * 1.5), 32 << 20)
    vmem_limit = min(vmem_limit, vmem_cap - (2 << 20))

    # Advisory cost estimate: weights are re-streamed once per row tile.
    grid0 = Rp // tm
    flops = int(2 * Rp * (Dp * Hp + Hp * Hp + Hp * Np))
    bytes_accessed = int(
        Rp * Dp * 2
        + grid0 * (Dp * Hp + Hp * Hp + Hp * Np) * 2
        + grid0 * (2 * Hp + Np) * 4
        + Rp * Np * 4)

    out = pl.pallas_call(
        functools.partial(_rcnn_head_kernel, kt=kt),
        out_shape=jax.ShapeDtypeStruct((Rp, Np), jnp.float32),
        grid_spec=pltpu.PrefetchScalarGridSpec(
            num_scalar_prefetch=0,
            grid=grid,
            in_specs=[
                pl.BlockSpec((tm, tk), x_map),     # x: streamed over K
                pl.BlockSpec((tk, Hp), w1_map),    # w1: streamed over K
                pl.BlockSpec((1, Hp), b1_map),     # b1: constant
                pl.BlockSpec((Hp, tj), w2_map),    # w2: streamed column chunks
                pl.BlockSpec((1, tj), b2_map),     # b2: streamed chunks
                pl.BlockSpec((tj, Np), wh_map),    # fused reg|cls W: streamed rows
                pl.BlockSpec((1, Np), bh_map),     # fused head bias: constant
            ],
            out_specs=pl.BlockSpec((tm, Np), out_map),
            scratch_shapes=[
                pltpu.VMEM((tm, Hp), jnp.float32),   # fc1 accumulator
                pltpu.VMEM((tm, Hp), jnp.bfloat16),  # h1 (post-ReLU)
            ],
        ),
        compiler_params=pltpu.CompilerParams(
            dimension_semantics=("parallel", "arbitrary"),
            vmem_limit_bytes=vmem_limit),
        cost_estimate=pl.CostEstimate(
            flops=flops, transcendentals=0, bytes_accessed=bytes_accessed),
    )(xp, prep["w1"], prep["b1"], prep["w2"], prep["b2"], prep["wh"], prep["bh"])

    reg = out[:R, :n_reg]
    cls = out[:R, n_reg:n_reg + n_cls]
    return reg, cls


# ---------------------------------------------------------------------------
# Full RCNN.forward
# ---------------------------------------------------------------------------
def rcnn_forward(feature_map, proposals, prep, *, roi_size, spatial_scale):
    """feature_map: (B, C, H, W); proposals: list of (N, 4) arrays."""
    B, C, H, W = feature_map.shape

    # pooled.view(batch_size, -1, ...) in the reference requires equal
    # per-image proposal counts -- enforce that assumption explicitly.
    n_per_image = proposals[0].shape[0]
    assert all(p.shape[0] == n_per_image for p in proposals), \
        "RCNN.forward view() assumes equal proposal counts per image"

    # Static upper bound for the adaptive sampling grid (sampling_ratio=-1).
    max_grid = int(math.ceil(max(H, W) / roi_size))

    pooled = roi_align(feature_map, proposals,
                       roi_size=roi_size, spatial_scale=spatial_scale,
                       max_grid=max_grid)                      # (R, C, rs, rs)
    R = pooled.shape[0]
    flat = pooled.reshape(R, -1)                               # flatten(1)

    reg, cls = rcnn_heads_pallas(flat, prep)
    reg = reg.reshape(B, n_per_image, -1)
    cls = cls.reshape(B, n_per_image, -1)
    return reg, cls


# ---------------------------------------------------------------------------
# Deterministic parameter init (std=0.01 like init_weight, biases = 0)
# ---------------------------------------------------------------------------
def make_params(key, d_in, hidden, num_classes):
    k1, k2, k3, k4 = jax.random.split(key, 4)
    std = 0.01
    return {
        "w1": std * jax.random.normal(k1, (d_in, hidden), jnp.float32),
        "b1": jnp.zeros((1, hidden), jnp.float32),
        "w2": std * jax.random.normal(k2, (hidden, hidden), jnp.float32),
        "b2": jnp.zeros((1, hidden), jnp.float32),
        "w_reg": std * jax.random.normal(k3, (hidden, num_classes * 4), jnp.float32),
        "b_reg": jnp.zeros((1, num_classes * 4), jnp.float32),
        "w_cls": std * jax.random.normal(k4, (hidden, num_classes), jnp.float32),
        "b_cls": jnp.zeros((1, num_classes), jnp.float32),
    }


def _ref_heads(x, params):
    """Pure-JAX reference of the head MLP (same bf16 compute dtype)."""
    cdt = jnp.bfloat16
    h1 = jnp.maximum(jnp.dot(x.astype(cdt), params["w1"].astype(cdt),
                             preferred_element_type=jnp.float32)
                     + params["b1"].reshape(1, -1), 0.0)
    h2 = jnp.maximum(jnp.dot(h1.astype(cdt), params["w2"].astype(cdt),
                             preferred_element_type=jnp.float32)
                     + params["b2"].reshape(1, -1), 0.0)
    reg = jnp.dot(h2.astype(cdt), params["w_reg"].astype(cdt),
                  preferred_element_type=jnp.float32) + params["b_reg"].reshape(1, -1)
    cls = jnp.dot(h2.astype(cdt), params["w_cls"].astype(cdt),
                  preferred_element_type=jnp.float32) + params["b_cls"].reshape(1, -1)
    return reg, cls


if __name__ == "__main__":
    key = jax.random.PRNGKey(0)
    B, C, H, W = 2, 4, 16, 16
    roi_size = 4
    num_classes = 5
    hidden = 128           # stands in for the module's hidden_dim=4096 at small scale
    spatial_scale = 0.5    # image coords are 2x the feature-map coords
    n_props = 8            # proposals per image
    img_size = H / spatial_scale  # 32

    k_fm, k_p0, k_p1, k_params = jax.random.split(key, 4)
    feature_map = jax.random.normal(k_fm, (B, C, H, W), jnp.float32)

    def make_proposals(k):
        pts = jax.random.uniform(k, (n_props, 4), jnp.float32,
                                 minval=0.0, maxval=img_size - 1.0)
        x1 = jnp.minimum(pts[:, 0], pts[:, 2])
        x2 = jnp.maximum(pts[:, 0], pts[:, 2])
        y1 = jnp.minimum(pts[:, 1], pts[:, 3])
        y2 = jnp.maximum(pts[:, 1], pts[:, 3])
        return jnp.stack([x1, y1, x2, y2], axis=-1)

    proposals = [make_proposals(k_p0), make_proposals(k_p1)]

    d_in = C * roi_size * roi_size
    params = make_params(k_params, d_in, hidden, num_classes)

    # One-time weight preparation (hoisted out of the per-call path).
    prep = prepare_head_params(params, num_classes=num_classes)

    roi_bbox_pred, roi_cls_scores = rcnn_forward(
        feature_map, proposals, prep,
        roi_size=roi_size, spatial_scale=spatial_scale)
    jax.block_until_ready((roi_bbox_pred, roi_cls_scores))

    assert roi_bbox_pred.shape == (B, n_props, num_classes * 4)
    assert roi_cls_scores.shape == (B, n_props, num_classes)
    assert bool(jnp.all(jnp.isfinite(roi_bbox_pred)))
    assert bool(jnp.all(jnp.isfinite(roi_cls_scores)))

    # Cross-check the Pallas head MLP against a pure-JAX reference (same bf16 casts).
    max_grid = int(math.ceil(max(H, W) / roi_size))
    pooled = roi_align(feature_map, proposals, roi_size=roi_size,
                       spatial_scale=spatial_scale, max_grid=max_grid)
    flat = pooled.reshape(pooled.shape[0], -1)
    ref_reg, ref_cls = _ref_heads(flat, params)
    ref_reg = ref_reg.reshape(B, n_props, -1)
    ref_cls = ref_cls.reshape(B, n_props, -1)
    assert bool(jnp.allclose(roi_bbox_pred, ref_reg, atol=2e-2, rtol=2e-2))
    assert bool(jnp.allclose(roi_cls_scores, ref_cls, atol=2e-2, rtol=2e-2))

    print("KERNEL_OK")
</pallas_src>

<mosaic_0001>
module attributes {stable_mosaic.version = 11 : i64} {
  func.func @_rcnn_head_kernel(%arg0: i32, %arg1: i32, %arg2: memref<16x128xbf16, #tpu.memory_space<vmem>>, %arg3: memref<128x128xbf16, #tpu.memory_space<vmem>>, %arg4: memref<1x128xf32, #tpu.memory_space<vmem>>, %arg5: memref<128x128xbf16, #tpu.memory_space<vmem>>, %arg6: memref<1x128xf32, #tpu.memory_space<vmem>>, %arg7: memref<128x128xbf16, #tpu.memory_space<vmem>>, %arg8: memref<1x128xf32, #tpu.memory_space<vmem>>, %arg9: memref<16x128xf32, #tpu.memory_space<vmem>>, %arg10: memref<16x128xf32, #tpu.memory_space<vmem>>, %arg11: memref<16x128xbf16, #tpu.memory_space<vmem>>) attributes {dimension_semantics = [#tpu.dimension_semantics<parallel>, #tpu.dimension_semantics<arbitrary>], iteration_bounds = array<i64: 1, 2>, scalar_prefetch = 0 : i64, scratch_operands = 2 : i64, tpu.core_type = #tpu.core_type<tc>, window_params = [{transform_indices = @transform_0, window_bounds = array<i64: 16, 128>}, {transform_indices = @transform_1, window_bounds = array<i64: 128, 128>}, {pipeline_mode = #tpu.pipeline_mode<synchronous>, transform_indices = @transform_2, window_bounds = array<i64: 1, 128>}, {transform_indices = @transform_3, window_bounds = array<i64: 128, 128>}, {transform_indices = @transform_4, window_bounds = array<i64: 1, 128>}, {transform_indices = @transform_5, window_bounds = array<i64: 128, 128>}, {pipeline_mode = #tpu.pipeline_mode<synchronous>, transform_indices = @transform_6, window_bounds = array<i64: 1, 128>}, {transform_indices = @transform_7, window_bounds = array<i64: 16, 128>}]} {
    %c0_i32 = arith.constant 0 : i32
    %0 = arith.cmpi eq, %arg1, %c0_i32 : i32
    %1 = arith.extui %0 : i1 to i32
    %c0_i32_0 = arith.constant 0 : i32
    %2 = arith.cmpi ne, %1, %c0_i32_0 : i32
    scf.if %2 {
      %c0 = arith.constant 0 : index
      %c0_8 = arith.constant 0 : index
      %15 = vector.load %arg4[%c0, %c0_8] : memref<1x128xf32, #tpu.memory_space<vmem>>, vector<1x128xf32>
      %16 = vector.shape_cast %15 : vector<1x128xf32> to vector<1x128xf32>
      %17 = vector.broadcast %16 : vector<1x128xf32> to vector<16x128xf32>
      %c0_9 = arith.constant 0 : index
      %c0_10 = arith.constant 0 : index
      %18 = vector.load %arg10[%c0_9, %c0_10] : memref<16x128xf32, #tpu.memory_space<vmem>>, vector<16x128xf32>
      tpu.vector_store %arg10[%c0_9, %c0_10], %17 {strides = array<i32>} : memref<16x128xf32, #tpu.memory_space<vmem>>, vector<16x128xf32>,
    } else {
    }
    %c1_i32 = arith.constant 1 : i32
    %3 = arith.cmpi slt, %arg1, %c1_i32 : i32
    %4 = arith.extui %3 : i1 to i32
    %c0_i32_1 = arith.constant 0 : i32
    %5 = arith.cmpi ne, %4, %c0_i32_1 : i32
    scf.if %5 {
      %c0 = arith.constant 0 : index
      %c0_8 = arith.constant 0 : index
      %15 = vector.load %arg10[%c0, %c0_8] : memref<16x128xf32, #tpu.memory_space<vmem>>, vector<16x128xf32>
      %c0_9 = arith.constant 0 : index
      %c0_10 = arith.constant 0 : index
      %16 = vector.load %arg2[%c0_9, %c0_10] : memref<16x128xbf16, #tpu.memory_space<vmem>>, vector<16x128xbf16>
      %c0_11 = arith.constant 0 : index
      %c0_12 = arith.constant 0 : index
      %17 = vector.load %arg3[%c0_11, %c0_12] : memref<128x128xbf16, #tpu.memory_space<vmem>>, vector<128x128xbf16>
      %cst = arith.constant dense<0.000000e+00> : vector<16x128xf32>
      %18 = tpu.matmul %16, %17, %cst {dimension_numbers = #tpu.dot_dimension_numbers<[1], [0], [0], [1], [0, 0, 1, 1], [], []>} : vector<16x128xbf16>, vector<128x128xbf16>, vector<16x128xf32> -> vector<16x128xf32>
      %19 = arith.addf %15, %18 : vector<16x128xf32>
      %c0_13 = arith.constant 0 : index
      %c0_14 = arith.constant 0 : index
      %20 = vector.load %arg10[%c0_13, %c0_14] : memref<16x128xf32, #tpu.memory_space<vmem>>, vector<16x128xf32>
      tpu.vector_store %arg10[%c0_13, %c0_14], %19 {strides = array<i32>} : memref<16x128xf32, #tpu.memory_space<vmem>>, vector<16x128xf32>,
    } else {
    }
    %c0_i32_2 = arith.constant 0 : i32
    %6 = arith.cmpi eq, %arg1, %c0_i32_2 : i32
    %7 = arith.extui %6 : i1 to i32
    %c0_i32_3 = arith.constant 0 : i32
    %8 = arith.cmpi ne, %7, %c0_i32_3 : i32
    scf.if %8 {
      %c0 = arith.constant 0 : index
      %c0_8 = arith.constant 0 : index
      %15 = vector.load %arg10[%c0, %c0_8] : memref<16x128xf32, #tpu.memory_space<vmem>>, vector<16x128xf32>
      %cst = arith.constant 0.000000e+00 : f32
      %16 = vector.broadcast %cst : f32 to vector<16x128xf32>
      %17 = arith.maximumf %15, %16 : vector<16x128xf32>
      %18 = arith.truncf %17 : vector<16x128xf32> to vector<16x128xbf16>
      %c0_9 = arith.constant 0 : index
      %c0_10 = arith.constant 0 : index
      %19 = vector.load %arg11[%c0_9, %c0_10] : memref<16x128xbf16, #tpu.memory_space<vmem>>, vector<16x128xbf16>
      tpu.vector_store %arg11[%c0_9, %c0_10], %18 {strides = array<i32>} : memref<16x128xbf16, #tpu.memory_space<vmem>>, vector<16x128xbf16>,
    } else {
    }
    %c1_i32_4 = arith.constant 1 : i32
    %9 = arith.cmpi eq, %arg1, %c1_i32_4 : i32
    %10 = arith.extui %9 : i1 to i32
    %c0_i32_5 = arith.constant 0 : i32
    %11 = arith.cmpi ne, %10, %c0_i32_5 : i32
    scf.if %11 {
      %c0 = arith.constant 0 : index
      %c0_8 = arith.constant 0 : index
      %15 = vector.load %arg8[%c0, %c0_8] : memref<1x128xf32, #tpu.memory_space<vmem>>, vector<1x128xf32>
      %16 = vector.shape_cast %15 : vector<1x128xf32> to vector<1x128xf32>
      %17 = vector.broadcast %16 : vector<1x128xf32> to vector<16x128xf32>
      %c0_9 = arith.constant 0 : index
      %c0_10 = arith.constant 0 : index
      %18 = vector.load %arg9[%c0_9, %c0_10] : memref<16x128xf32, #tpu.memory_space<vmem>>, vector<16x128xf32>
      tpu.vector_store %arg9[%c0_9, %c0_10], %17 {strides = array<i32>} : memref<16x128xf32, #tpu.memory_space<vmem>>, vector<16x128xf32>,
    } else {
    }
    %c1_i32_6 = arith.constant 1 : i32
    %12 = arith.cmpi sge, %arg1, %c1_i32_6 : i32
    %13 = arith.extui %12 : i1 to i32
    %c0_i32_7 = arith.constant 0 : i32
    %14 = arith.cmpi ne, %13, %c0_i32_7 : i32
    scf.if %14 {
      %c0 = arith.constant 0 : index
      %c0_8 = arith.constant 0 : index
      %15 = vector.load %arg11[%c0, %c0_8] : memref<16x128xbf16, #tpu.memory_space<vmem>>, vector<16x128xbf16>
      %c0_9 = arith.constant 0 : index
      %c0_10 = arith.constant 0 : index
      %16 = vector.load %arg5[%c0_9, %c0_10] : memref<128x128xbf16, #tpu.memory_space<vmem>>, vector<128x128xbf16>
      %cst = arith.constant dense<0.000000e+00> : vector<16x128xf32>
      %17 = tpu.matmul %15, %16, %cst {dimension_numbers = #tpu.dot_dimension_numbers<[1], [0], [0], [1], [0, 0, 1, 1], [], []>} : vector<16x128xbf16>, vector<128x128xbf16>, vector<16x128xf32> -> vector<16x128xf32>
      %c0_11 = arith.constant 0 : index
      %c0_12 = arith.constant 0 : index
      %18 = vector.load %arg6[%c0_11, %c0_12] : memref<1x128xf32, #tpu.memory_space<vmem>>, vector<1x128xf32>
      %19 = vector.broadcast %18 : vector<1x128xf32> to vector<16x128xf32>
      %20 = arith.addf %17, %19 : vector<16x128xf32>
      %cst_13 = arith.constant 0.000000e+00 : f32
      %21 = vector.broadcast %cst_13 : f32 to vector<16x128xf32>
      %22 = arith.maximumf %20, %21 : vector<16x128xf32>
      %c0_14 = arith.constant 0 : index
      %c0_15 = arith.constant 0 : index
      %23 = vector.load %arg9[%c0_14, %c0_15] : memref<16x128xf32, #tpu.memory_space<vmem>>, vector<16x128xf32>
      %24 = arith.truncf %22 : vector<16x128xf32> to vector<16x128xbf16>
      %c0_16 = arith.constant 0 : index
      %c0_17 = arith.constant 0 : index
      %25 = vector.load %arg7[%c0_16, %c0_17] : memref<128x128xbf16, #tpu.memory_space<vmem>>, vector<128x128xbf16>
      %cst_18 = arith.constant dense<0.000000e+00> : vector<16x128xf32>
      %26 = tpu.matmul %24, %25, %cst_18 {dimension_numbers = #tpu.dot_dimension_numbers<[1], [0], [0], [1], [0, 0, 1, 1], [], []>} : vector<16x128xbf16>, vector<128x128xbf16>, vector<16x128xf32> -> vector<16x128xf32>
      %27 = arith.addf %23, %26 : vector<16x128xf32>
      %c0_19 = arith.constant 0 : index
      %c0_20 = arith.constant 0 : index
      %28 = vector.load %arg9[%c0_19, %c0_20] : memref<16x128xf32, #tpu.memory_space<vmem>>, vector<16x128xf32>
      tpu.vector_store %arg9[%c0_19, %c0_20], %27 {strides = array<i32>} : memref<16x128xf32, #tpu.memory_space<vmem>>, vector<16x128xf32>,
    } else {
    }
    return
  }
  func.func @transform_0(%arg0: i32, %arg1: i32) -> (i32, i32) {
    %c0_i32 = arith.constant 0 : i32
    %0 = arith.minsi %arg1, %c0_i32 : i32
    %c0_i32_0 = arith.constant 0 : i32
    return %arg0, %0 : i32, i32
  }
  func.func @transform_1(%arg0: i32, %arg1: i32) -> (i32, i32) {
    %c0_i32 = arith.constant 0 : i32
    %0 = arith.minsi %arg1, %c0_i32 : i32
    %c0_i32_0 = arith.constant 0 : i32
    %c0_i32_1 = arith.constant 0 : i32
    return %0, %c0_i32_0 : i32, i32
  }
  func.func @transform_2(%arg0: i32, %arg1: i32) -> (i32, i32) {
    %c0_i32 = arith.constant 0 : i32
    %c0_i32_0 = arith.constant 0 : i32
    %c0_i32_1 = arith.constant 0 : i32
    return %c0_i32, %c0_i32_0 : i32, i32
  }
  func.func @transform_3(%arg0: i32, %arg1: i32) -> (i32, i32) {
    %c1_i32 = arith.constant 1 : i32
    %0 = arith.subi %arg1, %c1_i32 : i32
    %c0_i32 = arith.constant 0 : i32
    %c0_i32_0 = arith.constant 0 : i32
    %1 = arith.maxsi %c0_i32, %0 : i32
    %2 = arith.minsi %c0_i32_0, %1 : i32
    %c0_i32_1 = arith.constant 0 : i32
    %c0_i32_2 = arith.constant 0 : i32
    return %c0_i32_1, %2 : i32, i32
  }
  func.func @transform_4(%arg0: i32, %arg1: i32) -> (i32, i32) {
    %c1_i32 = arith.constant 1 : i32
    %0 = arith.subi %arg1, %c1_i32 : i32
    %c0_i32 = arith.constant 0 : i32
    %c0_i32_0 = arith.constant 0 : i32
    %1 = arith.maxsi %c0_i32, %0 : i32
    %2 = arith.minsi %c0_i32_0, %1 : i32
    %c0_i32_1 = arith.constant 0 : i32
    %c0_i32_2 = arith.constant 0 : i32
    return %c0_i32_1, %2 : i32, i32
  }
  func.func @transform_5(%arg0: i32, %arg1: i32) -> (i32, i32) {
    %c1_i32 = arith.constant 1 : i32
    %0 = arith.subi %arg1, %c1_i32 : i32
    %c0_i32 = arith.constant 0 : i32
    %c0_i32_0 = arith.constant 0 : i32
    %1 = arith.maxsi %c0_i32, %0 : i32
    %2 = arith.minsi %c0_i32_0, %1 : i32
    %c0_i32_1 = arith.constant 0 : i32
    %c0_i32_2 = arith.constant 0 : i32
    return %2, %c0_i32_1 : i32, i32
  }
  func.func @transform_6(%arg0: i32, %arg1: i32) -> (i32, i32) {
    %c0_i32 = arith.constant 0 : i32
    %c0_i32_0 = arith.constant 0 : i32
    %c0_i32_1 = arith.constant 0 : i32
    return %c0_i32, %c0_i32_0 : i32, i32
  }
  func.func @transform_7(%arg0: i32, %arg1: i32) -> (i32, i32) {
    %c0_i32 = arith.constant 0 : i32
    %c0_i32_0 = arith.constant 0 : i32
    return %arg0, %c0_i32 : i32, i32
  }
}

</mosaic_0001>

<llo_original>
// kernel: tpu_custom_call.1
$region0: #{tpu_custom_call.1}
  #allocation0 [shape = 'u32[]', space=smem, size = 0x4, offset = 0x4, fixed_abs, tag = 'smem constant byte address 0x4 - core index']
  #allocation1 [shape = 'u32[144,128]{1,0:T(1,128)}', space=vmem, size = 0x12000, scoped, tag = 'internal scratch']
  #allocation2 [shape = 'f32[16,128]{1,0:T(8,128)}', space=vmem, size = 0x2000, scoped, tag = 'scratch operand']
  #allocation3 [shape = 'bf16[16,128]{1,0:T(8,128)(2,1)}', space=vmem, size = 0x1000, scoped, tag = 'scratch operand']
  %s0 = inlined_call_operand.hbm [shape: bf16[16,128], index: 0, kind: input, shape index: {}]
  %s1 = inlined_call_operand.hbm [shape: bf16[128,128], index: 1, kind: input, shape index: {}]
  %s2 = inlined_call_operand.vmem [shape: f32[1,128], index: 2, kind: input, shape index: {}]
  %s3 = inlined_call_operand.hbm [shape: bf16[128,128], index: 3, kind: input, shape index: {}]
  %s4 = inlined_call_operand.vmem [shape: f32[1,128], index: 4, kind: input, shape index: {}]
  %s5 = inlined_call_operand.hbm [shape: bf16[128,128], index: 5, kind: input, shape index: {}]
  %s6 = inlined_call_operand.vmem [shape: f32[1,128], index: 6, kind: input, shape index: {}]
  %s7 = inlined_call_operand.hbm [shape: f32[16,128], index: 7, kind: output, shape index: {}]
  %s8 = sld [smem:[#allocation0]]
  $region97: #{tpu_custom_call.1} parent=0
    _
  %s10 = ssub.s32 1, %s8
  %s11 = scalar_select 0, %s10, %s8
  $region1: #{tpu_custom_call.1} parent=0
    #allocation4 [shape = 'u8[8192]{0}', space=vmem, size = 0x2000, scoped, tag = 'input window, operand 0']
    #allocation5 [shape = 's32[2]{0}', space=sflag, size = 0x8, scoped, tag = 'scoped memory for tpu_custom_call.1']
    #allocation6 [shape = 's32[2]{0}', space=sflag, size = 0x8, scoped, tag = 'scoped memory for tpu_custom_call.1']
    #allocation7 [shape = 'u8[65536]{0}', space=vmem, size = 0x10000, scoped, tag = 'input window, operand 1']
    #allocation8 [shape = 's32[2]{0}', space=sflag, size = 0x8, scoped, tag = 'scoped memory for tpu_custom_call.1']
    #allocation9 [shape = 'u8[65536]{0}', space=vmem, size = 0x10000, scoped, tag = 'input window, operand 3']
    #allocation10 [shape = 'u8[65536]{0}', space=vmem, size = 0x10000, scoped, tag = 'input window, operand 5']
    #allocation11 [shape = 's32[2]{0}', space=sflag, size = 0x8, scoped, tag = 'scoped memory for tpu_custom_call.1']
    #allocation12 [shape = 'u8[8192]{0}', space=vmem, size = 0x2000, scoped, tag = 'output window, operand 0, single buffered']
    %12 = vsyncpa [#allocation5], 0
    %s13 = scalar_lea.sflag [#allocation5], 1
    %14 = vsyncpa %s13, 0
    %15 = vsyncpa [#allocation8], 0
    %s16 = scalar_lea.sflag [#allocation8], 1
    %17 = vsyncpa %s16, 0
    %18 = vsyncpa [#allocation11], 0
    %s19 = scalar_lea.sflag [#allocation11], 1
    %20 = vsyncpa %s19, 0
    %21 = vsyncpa [#allocation6], 0
    loop: start=0, step=1, limit=4
    $region2: #{tpu_custom_call.1} parent=1 // loop_pre_header
      _
    $region3: #{tpu_custom_call.1} parent=1 // loop_header
      %s23 = sphi 0, %s27
      %p24 = scmp.ge.s32.totalorder %s23, 4
      %s30 = sphi 0, %s42
      %s31 = sphi 0, %s38
      %s32 = sphi 0, %s30
      %s33 = sphi 0, %s31
      %s34 = sphi 0, %s32
      %s35 = sphi 0, %s33
      %s51 = sphi 0, %s53
      %s54 = sphi 0, %s51
      %s55 = sphi 0, %s54
      %s71 = sphi 0, %s55
      %s81 = sphi 0, %s83
      %s84 = sphi 0, %s81
      %s85 = sphi 0, %s84
      %s101 = sphi 0, %s85
      %s105 = sphi 0, %s105
      %s107 = sphi 0, %s105
      %s108 = sphi 0, %s107
      %s122 = sphi 0, %s108
      %s138 = sphi 0, %s140
      %s141 = sphi 0, %s138
      %s142 = sphi 0, %s141
      %s158 = sphi 0, %s142
      %s174 = sphi 0, %s176
      %s177 = sphi 0, %s174
      %s178 = sphi 0, %s177
      %s194 = sphi 0, %s178
      %s210 = sphi 0, %s212
      %s213 = sphi 0, %s210
      %s214 = sphi 0, %s213
      %s230 = sphi 0, %s214
      %s234 = sphi 0, %s234
      %s236 = sphi 0, %s234
      %s237 = sphi 0, %s236
      %s251 = sphi 0, %s237
      %s257 = sphi 0, %s259
      %s260 = sphi 0, %s257
      %s261 = sphi 0, %s260
      %s277 = sphi 0, %s261
    $region4: #{tpu_custom_call.1} parent=1 // loop_header_branch
      %26 = sbr.rel (%p24) target = $region8
    $region5: #{tpu_custom_call.1} parent=1 // loop_body
      %s28 = ssub.s32 %s23, 1
      %s29 = ssub.s32 %s23, 2
      %s36 = sadd.s32 1, %s31
      %p37 = scmp.ge.s32.totalorder %s36, 2
      %s38 = scalar_select %p37, 0, %s36
      %s39 = sadd.s32 1, %s30
      %s40 = scalar_select %p37, %s39, %s30
      %p41 = scmp.ge.s32.totalorder %s40, 1
      %s42 = scalar_select %p41, 0, %s40
      %p43 = scmp.lt.s32.totalorder %s31, 0
      %s44 = scalar_select %p43, %s31, 0
      %p45 = scmp.lt.s32.totalorder %s38, 0
      %s46 = scalar_select %p45, %s38, 0
      %s47 = ssub.s32 %s30, %s42
      %s48 = ssub.s32 %s44, %s46
      %s49 = sor.u32 %s47, %s48
      %p50 = scmp.eq.s32.totalorder %s49, 0
      %s52 = sadd.s32 %s51, 1
      %s53 = scalar_select %p50, %s51, %s52
      %p56 = pneg %p50
      %p57 = scmp.eq.s32.totalorder %s23, 1
      %p58 = por %p56, %p57
      %p59 = scmp.ne.s32.totalorder %s51, %s54
      %p60 = scmp.eq.s32.totalorder %s23, 0
      %p61 = por %p59, %p60
      %p62 = scmp.ne.s32.totalorder %s51, %s54
      %p63 = scmp.eq.s32.totalorder %s28, 1
      %p64 = por %p62, %p63
      %p65 = scmp.ne.s32.totalorder %s54, %s55
      %p66 = scmp.eq.s32.totalorder %s28, 0
      %p67 = por %p65, %p66
      %p68 = scmp.ne.s32.totalorder %s54, %s55
      %p69 = scmp.eq.s32.totalorder %s29, 1
      %p70 = por %p68, %p69
      %p72 = scmp.ne.s32.totalorder %s55, %s71
      %p73 = scmp.eq.s32.totalorder %s29, 0
      %p74 = por %p72, %p73
      %p75 = scmp.lt.s32.totalorder %s31, 0
      %s76 = scalar_select %p75, %s31, 0
      %p77 = scmp.lt.s32.totalorder %s38, 0
      %s78 = scalar_select %p77, %s38, 0
      %s79 = ssub.s32 %s76, %s78
      %p80 = scmp.eq.s32.totalorder %s79, 0
      %s82 = sadd.s32 %s81, 1
      %s83 = scalar_select %p80, %s81, %s82
      %p86 = pneg %p80
      %p87 = scmp.eq.s32.totalorder %s23, 1
      %p88 = por %p86, %p87
      %p89 = scmp.ne.s32.totalorder %s81, %s84
      %p90 = scmp.eq.s32.totalorder %s23, 0
      %p91 = por %p89, %p90
      %p92 = scmp.ne.s32.totalorder %s81, %s84
      %p93 = scmp.eq.s32.totalorder %s28, 1
      %p94 = por %p92, %p93
      %p95 = scmp.ne.s32.totalorder %s84, %s85
      %p96 = scmp.eq.s32.totalorder %s28, 0
      %p97 = por %p95, %p96
      %p98 = scmp.ne.s32.totalorder %s84, %s85
      %p99 = scmp.eq.s32.totalorder %s29, 1
      %p100 = por %p98, %p99
      %p102 = scmp.ne.s32.totalorder %s85, %s101
      %p103 = scmp.eq.s32.totalorder %s29, 0
      %p104 = por %p102, %p103
      %s106 = sadd.s32 %s105, 1
      %p109 = scmp.eq.s32.totalorder %s23, 1
      %p110 = scmp.ne.s32.totalorder %s105, %s107
      %p111 = scmp.eq.s32.totalorder %s23, 0
      %p112 = por %p110, %p111
      %p113 = scmp.ne.s32.totalorder %s105, %s107
      %p114 = scmp.eq.s32.totalorder %s28, 1
      %p115 = por %p113, %p114
      %p116 = scmp.ne.s32.totalorder %s107, %s108
      %p117 = scmp.eq.s32.totalorder %s28, 0
      %p118 = por %p116, %p117
      %p119 = scmp.ne.s32.totalorder %s107, %s108
      %p120 = scmp.eq.s32.totalorder %s29, 1
      %p121 = por %p119, %p120
      %p123 = scmp.ne.s32.totalorder %s108, %s122
      %p124 = scmp.eq.s32.totalorder %s29, 0
      %p125 = por %p123, %p124
      %s126 = ssub.s32 %s31, 1
      %p127 = scmp.gt.s32.totalorder %s126, 0
      %s128 = scalar_select %p127, %s126, 0
      %p129 = scmp.lt.s32.totalorder %s128, 0
      %s130 = scalar_select %p129, %s128, 0
      %s131 = ssub.s32 %s38, 1
      %p132 = scmp.gt.s32.totalorder %s131, 0
      %s133 = scalar_select %p132, %s131, 0
      %p134 = scmp.lt.s32.totalorder %s133, 0
      %s135 = scalar_select %p134, %s133, 0
      %s136 = ssub.s32 %s130, %s135
      %p137 = scmp.eq.s32.totalorder %s136, 0
      %s139 = sadd.s32 %s138, 1
      %s140 = scalar_select %p137, %s138, %s139
      %p143 = pneg %p137
      %p144 = scmp.eq.s32.totalorder %s23, 1
      %p145 = por %p143, %p144
      %p146 = scmp.ne.s32.totalorder %s138, %s141
      %p147 = scmp.eq.s32.totalorder %s23, 0
      %p148 = por %p146, %p147
      %p149 = scmp.ne.s32.totalorder %s138, %s141
      %p150 = scmp.eq.s32.totalorder %s28, 1
      %p151 = por %p149, %p150
      %p152 = scmp.ne.s32.totalorder %s141, %s142
      %p153 = scmp.eq.s32.totalorder %s28, 0
      %p154 = por %p152, %p153
      %p155 = scmp.ne.s32.totalorder %s141, %s142
      %p156 = scmp.eq.s32.totalorder %s29, 1
      %p157 = por %p155, %p156
      %p159 = scmp.ne.s32.totalorder %s142, %s158
      %p160 = scmp.eq.s32.totalorder %s29, 0
      %p161 = por %p159, %p160
      %s162 = ssub.s32 %s31, 1
      %p163 = scmp.gt.s32.totalorder %s162, 0
      %s164 = scalar_select %p163, %s162, 0
      %p165 = scmp.lt.s32.totalorder %s164, 0
      %s166 = scalar_select %p165, %s164, 0
      %s167 = ssub.s32 %s38, 1
      %p168 = scmp.gt.s32.totalorder %s167, 0
      %s169 = scalar_select %p168, %s167, 0
      %p170 = scmp.lt.s32.totalorder %s169, 0
      %s171 = scalar_select %p170, %s169, 0
      %s172 = ssub.s32 %s166, %s171
      %p173 = scmp.eq.s32.totalorder %s172, 0
      %s175 = sadd.s32 %s174, 1
      %s176 = scalar_select %p173, %s174, %s175
      %p179 = pneg %p173
      %p180 = scmp.eq.s32.totalorder %s23, 1
      %p181 = por %p179, %p180
      %p182 = scmp.ne.s32.totalorder %s174, %s177
      %p183 = scmp.eq.s32.totalorder %s23, 0
      %p184 = por %p182, %p183
      %p185 = scmp.ne.s32.totalorder %s174, %s177
      %p186 = scmp.eq.s32.totalorder %s28, 1
      %p187 = por %p185, %p186
      %p188 = scmp.ne.s32.totalorder %s177, %s178
      %p189 = scmp.eq.s32.totalorder %s28, 0
      %p190 = por %p188, %p189
      %p191 = scmp.ne.s32.totalorder %s177, %s178
      %p192 = scmp.eq.s32.totalorder %s29, 1
      %p193 = por %p191, %p192
      %p195 = scmp.ne.s32.totalorder %s178, %s194
      %p196 = scmp.eq.s32.totalorder %s29, 0
      %p197 = por %p195, %p196
      %s198 = ssub.s32 %s31, 1
      %p199 = scmp.gt.s32.totalorder %s198, 0
      %s200 = scalar_select %p199, %s198, 0
      %p201 = scmp.lt.s32.totalorder %s200, 0
      %s202 = scalar_select %p201, %s200, 0
      %s203 = ssub.s32 %s38, 1
      %p204 = scmp.gt.s32.totalorder %s203, 0
      %s205 = scalar_select %p204, %s203, 0
      %p206 = scmp.lt.s32.totalorder %s205, 0
      %s207 = scalar_select %p206, %s205, 0
      %s208 = ssub.s32 %s202, %s207
      %p209 = scmp.eq.s32.totalorder %s208, 0
      %s211 = sadd.s32 %s210, 1
      %s212 = scalar_select %p209, %s210, %s211
      %p215 = pneg %p209
      %p216 = scmp.eq.s32.totalorder %s23, 1
      %p217 = por %p215, %p216
      %p218 = scmp.ne.s32.totalorder %s210, %s213
      %p219 = scmp.eq.s32.totalorder %s23, 0
      %p220 = por %p218, %p219
      %p221 = scmp.ne.s32.totalorder %s210, %s213
      %p222 = scmp.eq.s32.totalorder %s28, 1
      %p223 = por %p221, %p222
      %p224 = scmp.ne.s32.totalorder %s213, %s214
      %p225 = scmp.eq.s32.totalorder %s28, 0
      %p226 = por %p224, %p225
      %p227 = scmp.ne.s32.totalorder %s213, %s214
      %p228 = scmp.eq.s32.totalorder %s29, 1
      %p229 = por %p227, %p228
      %p231 = scmp.ne.s32.totalorder %s214, %s230
      %p232 = scmp.eq.s32.totalorder %s29, 0
      %p233 = por %p231, %p232
      %s235 = sadd.s32 %s234, 1
      %p238 = scmp.eq.s32.totalorder %s23, 1
      %p239 = scmp.ne.s32.totalorder %s234, %s236
      %p240 = scmp.eq.s32.totalorder %s23, 0
      %p241 = por %p239, %p240
      %p242 = scmp.ne.s32.totalorder %s234, %s236
      %p243 = scmp.eq.s32.totalorder %s28, 1
      %p244 = por %p242, %p243
      %p245 = scmp.ne.s32.totalorder %s236, %s237
      %p246 = scmp.eq.s32.totalorder %s28, 0
      %p247 = por %p245, %p246
      %p248 = scmp.ne.s32.totalorder %s236, %s237
      %p249 = scmp.eq.s32.totalorder %s29, 1
      %p250 = por %p248, %p249
      %p252 = scmp.ne.s32.totalorder %s237, %s251
      %p253 = scmp.eq.s32.totalorder %s29, 0
      %p254 = por %p252, %p253
      %s255 = ssub.s32 %s30, %s42
      %p256 = scmp.eq.s32.totalorder %s255, 0
      %s258 = sadd.s32 %s257, 1
      %s259 = scalar_select %p256, %s257, %s258
      %p262 = pneg %p256
      %p263 = scmp.eq.s32.totalorder %s23, 1
      %p264 = por %p262, %p263
      %p265 = scmp.ne.s32.totalorder %s257, %s260
      %p266 = scmp.eq.s32.totalorder %s23, 0
      %p267 = por %p265, %p266
      %p268 = scmp.ne.s32.totalorder %s257, %s260
      %p269 = scmp.eq.s32.totalorder %s28, 1
      %p270 = por %p268, %p269
      %p271 = scmp.ne.s32.totalorder %s260, %s261
      %p272 = scmp.eq.s32.totalorder %s28, 0
      %p273 = por %p271, %p272
      %p274 = scmp.ne.s32.totalorder %s260, %s261
      %p275 = scmp.eq.s32.totalorder %s29, 1
      %p276 = por %p274, %p275
      %p278 = scmp.ne.s32.totalorder %s261, %s277
      %p279 = scmp.eq.s32.totalorder %s29, 0
      %p280 = por %p278, %p279
      %p281 = scmp.le.s32.totalorder 1, %s23
      %p282 = scmp.lt.s32.totalorder %s23, 3
      %p283 = pnand %p281, %p282
      %p284 = pneg %p283
      // Predicated region
      $region9: #{tpu_custom_call.1} parent=5 // pred_check
        _
      $region10: #{tpu_custom_call.1} parent=5 // pred_check_branch
        %286 = sbr.rel (%p283) target = $region12
      $region11: #{tpu_custom_call.1} parent=5 // pred_region
        %s287 = ssub.s32 %s23, 1
        // Predicated region
        $region13: #{tpu_custom_call.1} parent=11 // pred_check
          %p288 = pneg %p118
        $region14: #{tpu_custom_call.1} parent=11 // pred_check_branch
          %290 = sbr.rel (%p288) target = $region16
        $region15: #{tpu_custom_call.1} parent=11 // pred_region
          _
        $region16: #{tpu_custom_call.1} parent=11 // pred_fallthru
          _
        // Predicated region
        $region17: #{tpu_custom_call.1} parent=11 // pred_check
          %p291 = pneg %p247
        $region18: #{tpu_custom_call.1} parent=11 // pred_check_branch
          %293 = sbr.rel (%p291) target = $region20
        $region19: #{tpu_custom_call.1} parent=11 // pred_region
          _
        $region20: #{tpu_custom_call.1} parent=11 // pred_fallthru
          _
      $region12: #{tpu_custom_call.1} parent=5 // pred_fallthru
        _
      %p294 = scmp.lt.s32.totalorder %s23, 2
      // Predicated region
      $region21: #{tpu_custom_call.1} parent=5 // pred_check
        %p295 = pneg %p294
      $region22: #{tpu_custom_call.1} parent=5 // pred_check_branch
        %297 = sbr.rel (%p295) target = $region24
      $region23: #{tpu_custom_call.1} parent=5 // pred_region
        // Predicated region
        $region25: #{tpu_custom_call.1} parent=23 // pred_check
          %p298 = pneg %p61
        $region26: #{tpu_custom_call.1} parent=23 // pred_check_branch
          %300 = sbr.rel (%p298) target = $region28
        $region27: #{tpu_custom_call.1} parent=23 // pred_region
          %s301 = sand.u32 %s51, 1
          %s302 = scalar_lea.sflag [#allocation5], %s301
          %s303 = sand.u32 %s51, 1
          %s304 = smul.addr %s303, 8
          %s305 = scalar_lea.vmem [#allocation4], %s304
          %p306 = scmp.lt.s32.totalorder %s31, 0
          %s307 = scalar_select %p306, %s31, 0
          %s308 = smul.u32 2, %s30
          %s310 = ssub.s32 128, 128
          %311 = vsyncadd %s302, %s310
          %s312 = sadd.s32 %s307, %s308
          %s313 = smul.addr %s312, 64
          %s314 = scalar_lea.hbm %s0, %s313
          %s315 = sshll.u32 %s305, 4
          %s316 = int_to_ptr.vmem [resolvable:$true] %s315
          %321 = dma.hbm_to_vmem [thread:$0]  %s314, 128, %s316, %s302, 64, 64, 4
        $region28: #{tpu_custom_call.1} parent=23 // pred_fallthru
          _
        // Predicated region
        $region29: #{tpu_custom_call.1} parent=23 // pred_check
          %p322 = pneg %p91
        $region30: #{tpu_custom_call.1} parent=23 // pred_check_branch
          %324 = sbr.rel (%p322) target = $region32
        $region31: #{tpu_custom_call.1} parent=23 // pred_region
          %s325 = sand.u32 %s23, 1
          %s326 = scalar_lea.sflag [#allocation8], %s325
          %s327 = sand.u32 %s81, 1
          %s328 = smul.addr %s327, 64
          %s329 = scalar_lea.vmem [#allocation7], %s328
          %p330 = scmp.lt.s32.totalorder %s31, 0
          %s331 = scalar_select %p330, %s31, 0
          %s332 = smul.u32 16, %s331
          %s334 = ssub.s32 1024, 1024
          %335 = vsyncadd %s326, %s334
          %s336 = smul.addr %s332, 64
          %s337 = scalar_lea.hbm %s1, %s336
          %s338 = sshll.u32 %s329, 4
          %s339 = int_to_ptr.vmem [resolvable:$true] %s338
          %344 = dma.hbm_to_vmem [thread:$0]  %s337, 1024, %s339, %s326, 64, 64, 4
        $region32: #{tpu_custom_call.1} parent=23 // pred_fallthru
          _
        // Predicated region
        $region33: #{tpu_custom_call.1} parent=23 // pred_check
          %p345 = pneg %p148
        $region34: #{tpu_custom_call.1} parent=23 // pred_check_branch
          %347 = sbr.rel (%p345) target = $region36
        $region35: #{tpu_custom_call.1} parent=23 // pred_region
          %s348 = sand.u32 %s23, 1
          %s349 = scalar_lea.sflag [#allocation8], %s348
          %s350 = sand.u32 %s138, 1
          %s351 = smul.addr %s350, 64
          %s352 = scalar_lea.vmem [#allocation9], %s351
          %s353 = ssub.s32 %s31, 1
          %p354 = scmp.gt.s32.totalorder %s353, 0
          %s355 = scalar_select %p354, %s353, 0
          %p356 = scmp.lt.s32.totalorder %s355, 0
          %s357 = scalar_select %p356, %s355, 0
          %s359 = ssub.s32 1024, 1024
          %360 = vsyncadd %s349, %s359
          %s361 = smul.addr %s357, 64
          %s362 = scalar_lea.hbm %s3, %s361
          %s363 = sshll.u32 %s352, 4
          %s364 = int_to_ptr.vmem [resolvable:$true] %s363
          %369 = dma.hbm_to_vmem [thread:$0]  %s362, 1024, %s364, %s349, 64, 64, 4
        $region36: #{tpu_custom_call.1} parent=23 // pred_fallthru
          _
        // Predicated region
        $region37: #{tpu_custom_call.1} parent=23 // pred_check
          %p370 = pneg %p184
        $region38: #{tpu_custom_call.1} parent=23 // pred_check_branch
          %372 = sbr.rel (%p370) target = $region40
        $region39: #{tpu_custom_call.1} parent=23 // pred_region
          %s373 = ssub.s32 %s31, 1
          %p374 = scmp.gt.s32.totalorder %s373, 0
          %s375 = scalar_select %p374, %s373, 0
          %p376 = scmp.lt.s32.totalorder %s375, 0
          %s377 = scalar_select %p376, %s375, 0
          %p378 = scmp.lt.s32.totalorder %s377, 0
          %s379 = scalar_select %p378, %s377, 0
          %s380 = scalar_lea.vmem %s4, %s379
          %s381 = ssub.s32 %s31, 1
          %p382 = scmp.gt.s32.totalorder %s381, 0
          %s383 = scalar_select %p382, %s381, 0
          %p384 = scmp.lt.s32.totalorder %s383, 0
          %s385 = scalar_select %p384, %s383, 0
        $region40: #{tpu_custom_call.1} parent=23 // pred_fallthru
          _
        // Predicated region
        $region41: #{tpu_custom_call.1} parent=23 // pred_check
          %p386 = pneg %p220
        $region42: #{tpu_custom_call.1} parent=23 // pred_check_branch
          %388 = sbr.rel (%p386) target = $region44
        $region43: #{tpu_custom_call.1} parent=23 // pred_region
          %s389 = sand.u32 %s210, 1
          %s390 = scalar_lea.sflag [#allocation11], %s389
          %s391 = sand.u32 %s210, 1
          %s392 = smul.addr %s391, 64
          %s393 = scalar_lea.vmem [#allocation10], %s392
          %s394 = ssub.s32 %s31, 1
          %p395 = scmp.gt.s32.totalorder %s394, 0
          %s396 = scalar_select %p395, %s394, 0
          %p397 = scmp.lt.s32.totalorder %s396, 0
          %s398 = scalar_select %p397, %s396, 0
          %s399 = smul.u32 16, %s398
          %s401 = ssub.s32 1024, 1024
          %402 = vsyncadd %s390, %s401
          %s403 = smul.addr %s399, 64
          %s404 = scalar_lea.hbm %s5, %s403
          %s405 = sshll.u32 %s393, 4
          %s406 = int_to_ptr.vmem [resolvable:$true] %s405
          %411 = dma.hbm_to_vmem [thread:$0]  %s404, 1024, %s406, %s390, 64, 64, 4
        $region44: #{tpu_custom_call.1} parent=23 // pred_fallthru
          _
      $region24: #{tpu_custom_call.1} parent=5 // pred_fallthru
        _
      %p412 = scmp.le.s32.totalorder 1, %s23
      %p413 = scmp.lt.s32.totalorder %s23, 3
      %p414 = pnand %p412, %p413
      %p415 = pneg %p414
      // Predicated region
      $region45: #{tpu_custom_call.1} parent=5 // pred_check
        _
      $region46: #{tpu_custom_call.1} parent=5 // pred_check_branch
        %417 = sbr.rel (%p414) target = $region48
      $region47: #{tpu_custom_call.1} parent=5 // pred_region
        %s418 = ssub.s32 %s23, 1
        %s419 = sand.u32 %s54, 1
        %s420 = scalar_lea.sflag [#allocation5], %s419
        %s421 = sand.u32 %s54, 1
        %s422 = smul.addr %s421, 8
        %s423 = scalar_lea.vmem [#allocation4], %s422
        // Predicated region
        $region49: #{tpu_custom_call.1} parent=47 // pred_check
          %p424 = pneg %p67
        $region50: #{tpu_custom_call.1} parent=47 // pred_check_branch
          %426 = sbr.rel (%p424) target = $region52
        $region51: #{tpu_custom_call.1} parent=47 // pred_region
          %427 = dma.done %s420, 128
        $region52: #{tpu_custom_call.1} parent=47 // pred_fallthru
          _
        %s428 = sand.u32 %s28, 1
        %s429 = scalar_lea.sflag [#allocation8], %s428
        %s430 = sand.u32 %s84, 1
        %s431 = smul.addr %s430, 64
        %s432 = scalar_lea.vmem [#allocation7], %s431
        // Predicated region
        $region53: #{tpu_custom_call.1} parent=47 // pred_check
          %p433 = pneg %p97
        $region54: #{tpu_custom_call.1} parent=47 // pred_check_branch
          %435 = sbr.rel (%p433) target = $region56
        $region55: #{tpu_custom_call.1} parent=47 // pred_region
          %436 = dma.done %s429, 1024
        $region56: #{tpu_custom_call.1} parent=47 // pred_fallthru
          _
        %s437 = sand.u32 %s28, 1
        %s438 = scalar_lea.sflag [#allocation8], %s437
        %s439 = sand.u32 %s141, 1
        %s440 = smul.addr %s439, 64
        %s441 = scalar_lea.vmem [#allocation9], %s440
        // Predicated region
        $region57: #{tpu_custom_call.1} parent=47 // pred_check
          %p442 = pneg %p154
        $region58: #{tpu_custom_call.1} parent=47 // pred_check_branch
          %444 = sbr.rel (%p442) target = $region60
        $region59: #{tpu_custom_call.1} parent=47 // pred_region
          %445 = dma.done %s438, 1024
        $region60: #{tpu_custom_call.1} parent=47 // pred_fallthru
          _
        %s446 = sand.u32 %s213, 1
        %s447 = scalar_lea.sflag [#allocation11], %s446
        %s448 = sand.u32 %s213, 1
        %s449 = smul.addr %s448, 64
        %s450 = scalar_lea.vmem [#allocation10], %s449
        // Predicated region
        $region61: #{tpu_custom_call.1} parent=47 // pred_check
          %p451 = pneg %p226
        $region62: #{tpu_custom_call.1} parent=47 // pred_check_branch
          %453 = sbr.rel (%p451) target = $region64
        $region63: #{tpu_custom_call.1} parent=47 // pred_region
          %454 = dma.done %s447, 1024
        $region64: #{tpu_custom_call.1} parent=47 // pred_fallthru
          _
        %s455 = sand.u32 %s54, 1
        %s456 = scalar_lea.sflag [#allocation5], %s455
        %s457 = sand.u32 %s54, 1
        %s458 = smul.addr %s457, 8
        %s459 = scalar_lea.vmem [#allocation4], %s458
        %p460 = pneg %p67
        %p461 = pneg %p64
        %s462 = sand.u32 %s28, 1
        %s463 = scalar_lea.sflag [#allocation8], %s462
        %s464 = sand.u32 %s84, 1
        %s465 = smul.addr %s464, 64
        %s466 = scalar_lea.vmem [#allocation7], %s465
        %p467 = pneg %p97
        %p468 = pneg %p94
        %p469 = pneg %p118
        %p470 = pneg %p115
        %s471 = sand.u32 %s28, 1
        %s472 = scalar_lea.sflag [#allocation8], %s471
        %s473 = sand.u32 %s141, 1
        %s474 = smul.addr %s473, 64
        %s475 = scalar_lea.vmem [#allocation9], %s474
        %p476 = pneg %p154
        %p477 = pneg %p151
        %s478 = ssub.s32 %s33, 1
        %p479 = scmp.gt.s32.totalorder %s478, 0
        %s480 = scalar_select %p479, %s478, 0
        %p481 = scmp.lt.s32.totalorder %s480, 0
        %s482 = scalar_select %p481, %s480, 0
        %p483 = scmp.lt.s32.totalorder %s482, 0
        %s484 = scalar_select %p483, %s482, 0
        %s485 = scalar_lea.vmem %s4, %s484
        %p486 = pneg %p190
        %p487 = pneg %p187
        %s488 = sand.u32 %s213, 1
        %s489 = scalar_lea.sflag [#allocation11], %s488
        %s490 = sand.u32 %s213, 1
        %s491 = smul.addr %s490, 64
        %s492 = scalar_lea.vmem [#allocation10], %s491
        %p493 = pneg %p226
        %p494 = pneg %p223
        %p495 = pneg %p247
        %p496 = pneg %p244
        %p497 = pneg %p273
        %p498 = pneg %p270
        %p499 = scmp.lt.s32.totalorder %s33, 0
        %s500 = scalar_select %p499, %s33, 0
        %s501 = smul.u32 2, %s32
        %p502 = scmp.lt.s32.totalorder %s33, 0
        %s503 = scalar_select %p502, %s33, 0
        %s504 = smul.u32 16, %s503
        %s505 = ssub.s32 %s33, 1
        %p506 = scmp.gt.s32.totalorder %s505, 0
        %s507 = scalar_select %p506, %s505, 0
        %p508 = scmp.lt.s32.totalorder %s507, 0
        %s509 = scalar_select %p508, %s507, 0
        %s510 = ssub.s32 %s33, 1
        %p511 = scmp.gt.s32.totalorder %s510, 0
        %s512 = scalar_select %p511, %s510, 0
        %p513 = scmp.lt.s32.totalorder %s512, 0
        %s514 = scalar_select %p513, %s512, 0
        %p515 = scmp.lt.s32.totalorder %s514, 0
        %s516 = scalar_select %p515, %s514, 0
        %s517 = scalar_lea.vmem %s4, %s516
        %s518 = ssub.s32 %s33, 1
        %p519 = scmp.gt.s32.totalorder %s518, 0
        %s520 = scalar_select %p519, %s518, 0
        %p521 = scmp.lt.s32.totalorder %s520, 0
        %s522 = scalar_select %p521, %s520, 0
        %s523 = ssub.s32 %s33, 1
        %p524 = scmp.gt.s32.totalorder %s523, 0
        %s525 = scalar_select %p524, %s523, 0
        %p526 = scmp.lt.s32.totalorder %s525, 0
        %s527 = scalar_select %p526, %s525, 0
        %s528 = smul.u32 16, %s527
        %s529 = smul.u32 2, %s32
        %p531 = scmp.eq.s32.totalorder %s33, 0
        // Predicated region
        $region65: #{tpu_custom_call.1} parent=47 // pred_check
          %p532 = pneg %p531
        $region66: #{tpu_custom_call.1} parent=47 // pred_check_branch
          %534 = sbr.rel (%p532) target = $region68
        $region67: #{tpu_custom_call.1} parent=47 // pred_region
          %v535 = vld [vmem:[%s2] sm:$0x1]
          %v537 = vlaneseq
          %v538 = vshrl.u32 %v537, 7
          %v539 = vsub.s32 0, %v538
          %v540 = vrot.slane %v535, %v539
          %542 = vst [vmem:[#allocation2] sm:$0xff] %v540
          %543 = vst [vmem:[#allocation2 + $0x8] sm:$0xff] %v540
        $region68: #{tpu_custom_call.1} parent=47 // pred_fallthru
          _
        %p544 = scmp.lt.s32.totalorder %s33, 1
        // Predicated region
        $region69: #{tpu_custom_call.1} parent=47 // pred_check
          %p545 = pneg %p544
        $region70: #{tpu_custom_call.1} parent=47 // pred_check_branch
          %547 = sbr.rel (%p545) target = $region72
        $region71: #{tpu_custom_call.1} parent=47 // pred_region
          %v548 = vld [vmem:[#allocation2] sm:$0xff]
          %v549 = vld [vmem:[#allocation2 + $0x8] sm:$0xff]
          %v550 = vld [vmem:[%s423] sm:$0xf]
          %v551 = vld [vmem:[%s423 + $0x4] sm:$0xf]
          %v552 = vld [vmem:[%s432] sm:$0xf]
          %v553 = vld [vmem:[%s432 + $0x4] sm:$0xf]
          %v554 = vld [vmem:[%s432 + $0x8] sm:$0xf]
          %v555 = vld [vmem:[%s432 + $0xc] sm:$0xf]
          %v556 = vld [vmem:[%s432 + $0x10] sm:$0xf]
          %v557 = vld [vmem:[%s432 + $0x14] sm:$0xf]
          %v558 = vld [vmem:[%s432 + $0x18] sm:$0xf]
          %v559 = vld [vmem:[%s432 + $0x1c] sm:$0xf]
          %v560 = vld [vmem:[%s432 + $0x20] sm:$0xf]
          %v561 = vld [vmem:[%s432 + $0x24] sm:$0xf]
          %v562 = vld [vmem:[%s432 + $0x28] sm:$0xf]
          %v563 = vld [vmem:[%s432 + $0x2c] sm:$0xf]
          %v564 = vld [vmem:[%s432 + $0x30] sm:$0xf]
          %v565 = vld [vmem:[%s432 + $0x34] sm:$0xf]
          %v566 = vld [vmem:[%s432 + $0x38] sm:$0xf]
          %v567 = vld [vmem:[%s432 + $0x3c] sm:$0xf]
          %v570 = vunpack.c.l.b16 %v550
          %v571 = vunpack.c.l.b16 %v551
          %v572 = vpack.c.b16 %v571, %v570
          %v590 = vunpack.c.l.b16 %v552
          %v591 = vunpack.c.l.b16 %v553
          %v592 = vunpack.c.l.b16 %v554
          %v593 = vunpack.c.l.b16 %v555
          %v594 = vunpack.c.l.b16 %v556
          %v595 = vunpack.c.l.b16 %v557
          %v596 = vunpack.c.l.b16 %v558
          %v597 = vunpack.c.l.b16 %v559
          %v598 = vunpack.c.l.b16 %v560
          %v599 = vunpack.c.l.b16 %v561
          %v600 = vunpack.c.l.b16 %v562
          %v601 = vunpack.c.l.b16 %v563
          %v602 = vunpack.c.l.b16 %v564
          %v603 = vunpack.c.l.b16 %v565
          %v604 = vunpack.c.l.b16 %v566
          %v605 = vunpack.c.l.b16 %v567
          %v606 = vpack.c.b16 %v591, %v590
          %v607 = vpack.c.b16 %v593, %v592
          %v608 = vpack.c.b16 %v595, %v594
          %v609 = vpack.c.b16 %v597, %v596
          %v610 = vpack.c.b16 %v599, %v598
          %v611 = vpack.c.b16 %v601, %v600
          %v612 = vpack.c.b16 %v603, %v602
          %v613 = vpack.c.b16 %v605, %v604
          %622 = vmatprep.subr.bf16.mxu0 0
          %623 = vmatpush1.bf16.msra.mxu0 %v613
          %624 = vmatprep.subr.bf16.mxu0 0
          %625 = vmatpush1.bf16.msra.mxu0 %v612
          %626 = vmatprep.subr.bf16.mxu0 0
          %627 = vmatpush1.bf16.msra.mxu0 %v611
          %628 = vmatprep.subr.bf16.mxu0 0
          %629 = vmatpush1.bf16.msra.mxu0 %v610
          %630 = vmatprep.subr.bf16.mxu0 0
          %631 = vmatpush1.bf16.msra.mxu0 %v609
          %632 = vmatprep.subr.bf16.mxu0 0
          %633 = vmatpush1.bf16.msra.mxu0 %v608
          %634 = vmatprep.subr.bf16.mxu0 0
          %635 = vmatpush1.bf16.msra.mxu0 %v607
          %636 = vmatprep.subr.bf16.mxu0 0
          %637 = vmatpush1.bf16.msra.mxu0 %v606
          %638 = vmatprep.subr.bf16.mxu0 0
          %639 = vmatpush2.bf16.msra.mxu0 0
          %640 = vmatprep.subr.bf16.mxu0 0
          %641 = vmatpush2.bf16.msra.mxu0 0
          %642 = vmatprep.subr.bf16.mxu0 0
          %643 = vmatpush2.bf16.msra.mxu0 0
          %644 = vmatprep.subr.bf16.mxu0 0
          %645 = vmatpush2.bf16.msra.mxu0 0
          %646 = vmatprep.subr.bf16.mxu0 0
          %647 = vmatpush2.bf16.msra.mxu0 0
          %648 = vmatprep.subr.bf16.mxu0 0
          %649 = vmatpush2.bf16.msra.mxu0 0
          %650 = vmatprep.subr.bf16.mxu0 0
          %651 = vmatpush2.bf16.msra.mxu0 0
          %652 = vmatprep.subr.bf16.mxu0 0
          %653 = vmatpush2.bf16.msra.mxu0 0
          %654 = vmatprep.mubr.bf16.mxu0 0
          %655 = vmatmul.mubr.bf16.gmra.mxu0 %v572
          %v656 = vpop.f32.mrf.mxu0
          %v657 = vadd.f32 0.0, %v656
          %v658 = vpop.f32.mrf.mxu0
          %v659 = vpop.f32.mrf.mxu0
          %v660 = vadd.f32 0.0, %v659
          %v661 = vpop.f32.mrf.mxu0
          %662 = vdwg.mxu0
          %v663 = vadd.f32 %v548, %v657
          %v664 = vadd.f32 %v549, %v660
          %665 = vst [vmem:[#allocation2] sm:$0xff] %v663
          %666 = vst [vmem:[#allocation2 + $0x8] sm:$0xff] %v664
        $region72: #{tpu_custom_call.1} parent=47 // pred_fallthru
          _
        // Predicated region
        $region73: #{tpu_custom_call.1} parent=47 // pred_check
          %p667 = pneg %p531
        $region74: #{tpu_custom_call.1} parent=47 // pred_check_branch
          %669 = sbr.rel (%p667) target = $region76
        $region75: #{tpu_custom_call.1} parent=47 // pred_region
          %v670 = vld [vmem:[#allocation2] sm:$0xff]
          %v671 = vld [vmem:[#allocation2 + $0x8] sm:$0xff]
          %v672 = vmax.f32 %v670, 0.0
          %v673 = vmax.f32 %v671, 0.0
          %v674 = vpack.c.bf16 %v673, %v672
          %v676 = vunpack.c.l.b16 %v674
          %v677 = vunpack.c.h.b16 %v674
          %v678 = vpack.c.b16 %v676, %v676
          %v679 = vpack.c.b16 %v677, %v677
          %682 = vst [vmem:[#allocation3] sm:$0xf] %v678
          %683 = vst [vmem:[#allocation3 + $0x4] sm:$0xf] %v679
        $region76: #{tpu_custom_call.1} parent=47 // pred_fallthru
          _
        %p684 = scmp.eq.s32.totalorder %s33, 1
        // Predicated region
        $region77: #{tpu_custom_call.1} parent=47 // pred_check
          %p685 = pneg %p684
        $region78: #{tpu_custom_call.1} parent=47 // pred_check_branch
          %687 = sbr.rel (%p685) target = $region80
        $region79: #{tpu_custom_call.1} parent=47 // pred_region
          %v688 = vld [vmem:[%s6] sm:$0x1]
          %v690 = vlaneseq
          %v691 = vshrl.u32 %v690, 7
          %v692 = vsub.s32 0, %v691
          %v693 = vrot.slane %v688, %v692
          %695 = vst [vmem:[#allocation12] sm:$0xff] %v693
          %696 = vst [vmem:[#allocation12 + $0x8] sm:$0xff] %v693
        $region80: #{tpu_custom_call.1} parent=47 // pred_fallthru
          _
        %p697 = scmp.ge.s32.totalorder %s33, 1
        // Predicated region
        $region81: #{tpu_custom_call.1} parent=47 // pred_check
          %p698 = pneg %p697
        $region82: #{tpu_custom_call.1} parent=47 // pred_check_branch
          %700 = sbr.rel (%p698) target = $region84
        $region83: #{tpu_custom_call.1} parent=47 // pred_region
          %v701 = vld [vmem:[#allocation3] sm:$0xf]
          %v702 = vld [vmem:[#allocation3 + $0x4] sm:$0xf]
          %v703 = vld [vmem:[%s441] sm:$0xf]
          %v704 = vld [vmem:[%s441 + $0x4] sm:$0xf]
          %v705 = vld [vmem:[%s441 + $0x8] sm:$0xf]
          %v706 = vld [vmem:[%s441 + $0xc] sm:$0xf]
          %v707 = vld [vmem:[%s441 + $0x10] sm:$0xf]
          %v708 = vld [vmem:[%s441 + $0x14] sm:$0xf]
          %v709 = vld [vmem:[%s441 + $0x18] sm:$0xf]
          %v710 = vld [vmem:[%s441 + $0x1c] sm:$0xf]
          %v711 = vld [vmem:[%s441 + $0x20] sm:$0xf]
          %v712 = vld [vmem:[%s441 + $0x24] sm:$0xf]
          %v713 = vld [vmem:[%s441 + $0x28] sm:$0xf]
          %v714 = vld [vmem:[%s441 + $0x2c] sm:$0xf]
          %v715 = vld [vmem:[%s441 + $0x30] sm:$0xf]
          %v716 = vld [vmem:[%s441 + $0x34] sm:$0xf]
          %v717 = vld [vmem:[%s441 + $0x38] sm:$0xf]
          %v718 = vld [vmem:[%s441 + $0x3c] sm:$0xf]
          %v719 = vld [vmem:[%s517] sm:$0x1]
          %v721 = vlaneseq
          %v722 = vshrl.u32 %v721, 7
          %v723 = vsub.s32 0, %v722
          %v724 = vrot.slane %v719, %v723
          %v728 = vunpack.c.l.b16 %v701
          %v729 = vunpack.c.l.b16 %v702
          %v730 = vpack.c.b16 %v729, %v728
          %v748 = vunpack.c.l.b16 %v703
          %v749 = vunpack.c.l.b16 %v704
          %v750 = vunpack.c.l.b16 %v705
          %v751 = vunpack.c.l.b16 %v706
          %v752 = vunpack.c.l.b16 %v707
          %v753 = vunpack.c.l.b16 %v708
          %v754 = vunpack.c.l.b16 %v709
          %v755 = vunpack.c.l.b16 %v710
          %v756 = vunpack.c.l.b16 %v711
          %v757 = vunpack.c.l.b16 %v712
          %v758 = vunpack.c.l.b16 %v713
          %v759 = vunpack.c.l.b16 %v714
          %v760 = vunpack.c.l.b16 %v715
          %v761 = vunpack.c.l.b16 %v716
          %v762 = vunpack.c.l.b16 %v717
          %v763 = vunpack.c.l.b16 %v718
          %v764 = vpack.c.b16 %v749, %v748
          %v765 = vpack.c.b16 %v751, %v750
          %v766 = vpack.c.b16 %v753, %v752
          %v767 = vpack.c.b16 %v755, %v754
          %v768 = vpack.c.b16 %v757, %v756
          %v769 = vpack.c.b16 %v759, %v758
          %v770 = vpack.c.b16 %v761, %v760
          %v771 = vpack.c.b16 %v763, %v762
          %780 = vmatprep.subr.bf16.mxu0 0
          %781 = vmatpush1.bf16.msra.mxu0 %v771
          %782 = vmatprep.subr.bf16.mxu0 0
          %783 = vmatpush1.bf16.msra.mxu0 %v770
          %784 = vmatprep.subr.bf16.mxu0 0
          %785 = vmatpush1.bf16.msra.mxu0 %v769
          %786 = vmatprep.subr.bf16.mxu0 0
          %787 = vmatpush1.bf16.msra.mxu0 %v768
          %788 = vmatprep.subr.bf16.mxu0 0
          %789 = vmatpush1.bf16.msra.mxu0 %v767
          %790 = vmatprep.subr.bf16.mxu0 0
          %791 = vmatpush1.bf16.msra.mxu0 %v766
          %792 = vmatprep.subr.bf16.mxu0 0
          %793 = vmatpush1.bf16.msra.mxu0 %v765
          %794 = vmatprep.subr.bf16.mxu0 0
          %795 = vmatpush1.bf16.msra.mxu0 %v764
          %796 = vmatprep.subr.bf16.mxu0 0
          %797 = vmatpush2.bf16.msra.mxu0 0
          %798 = vmatprep.subr.bf16.mxu0 0
          %799 = vmatpush2.bf16.msra.mxu0 0
          %800 = vmatprep.subr.bf16.mxu0 0
          %801 = vmatpush2.bf16.msra.mxu0 0
          %802 = vmatprep.subr.bf16.mxu0 0
          %803 = vmatpush2.bf16.msra.mxu0 0
          %804 = vmatprep.subr.bf16.mxu0 0
          %805 = vmatpush2.bf16.msra.mxu0 0
          %806 = vmatprep.subr.bf16.mxu0 0
          %807 = vmatpush2.bf16.msra.mxu0 0
          %808 = vmatprep.subr.bf16.mxu0 0
          %809 = vmatpush2.bf16.msra.mxu0 0
          %810 = vmatprep.subr.bf16.mxu0 0
          %811 = vmatpush2.bf16.msra.mxu0 0
          %812 = vmatprep.mubr.bf16.mxu0 0
          %813 = vmatmul.mubr.bf16.gmra.mxu0 %v730
          %v814 = vpop.f32.mrf.mxu0
          %v815 = vadd.f32 %v724, %v814
          %v816 = vpop.f32.mrf.mxu0
          %v817 = vpop.f32.mrf.mxu0
          %v818 = vadd.f32 %v724, %v817
          %v819 = vpop.f32.mrf.mxu0
          %820 = vdwg.mxu0
          %v821 = vmax.f32 %v815, 0.0
          %v822 = vmax.f32 %v818, 0.0
          %v823 = vld [vmem:[#allocation12] sm:$0xff]
          %v824 = vld [vmem:[#allocation12 + $0x8] sm:$0xff]
          %v825 = vpack.c.bf16 %v822, %v821
          %v826 = vld [vmem:[%s450] sm:$0xf]
          %v827 = vld [vmem:[%s450 + $0x4] sm:$0xf]
          %v828 = vld [vmem:[%s450 + $0x8] sm:$0xf]
          %v829 = vld [vmem:[%s450 + $0xc] sm:$0xf]
          %v830 = vld [vmem:[%s450 + $0x10] sm:$0xf]
          %v831 = vld [vmem:[%s450 + $0x14] sm:$0xf]
          %v832 = vld [vmem:[%s450 + $0x18] sm:$0xf]
          %v833 = vld [vmem:[%s450 + $0x1c] sm:$0xf]
          %v834 = vld [vmem:[%s450 + $0x20] sm:$0xf]
          %v835 = vld [vmem:[%s450 + $0x24] sm:$0xf]
          %v836 = vld [vmem:[%s450 + $0x28] sm:$0xf]
          %v837 = vld [vmem:[%s450 + $0x2c] sm:$0xf]
          %v838 = vld [vmem:[%s450 + $0x30] sm:$0xf]
          %v839 = vld [vmem:[%s450 + $0x34] sm:$0xf]
          %v840 = vld [vmem:[%s450 + $0x38] sm:$0xf]
          %v841 = vld [vmem:[%s450 + $0x3c] sm:$0xf]
          %v858 = vunpack.c.l.b16 %v826
          %v859 = vunpack.c.l.b16 %v827
          %v860 = vunpack.c.l.b16 %v828
          %v861 = vunpack.c.l.b16 %v829
          %v862 = vunpack.c.l.b16 %v830
          %v863 = vunpack.c.l.b16 %v831
          %v864 = vunpack.c.l.b16 %v832
          %v865 = vunpack.c.l.b16 %v833
          %v866 = vunpack.c.l.b16 %v834
          %v867 = vunpack.c.l.b16 %v835
          %v868 = vunpack.c.l.b16 %v836
          %v869 = vunpack.c.l.b16 %v837
          %v870 = vunpack.c.l.b16 %v838
          %v871 = vunpack.c.l.b16 %v839
          %v872 = vunpack.c.l.b16 %v840
          %v873 = vunpack.c.l.b16 %v841
          %v874 = vpack.c.b16 %v859, %v858
          %v875 = vpack.c.b16 %v861, %v860
          %v876 = vpack.c.b16 %v863, %v862
          %v877 = vpack.c.b16 %v865, %v864
          %v878 = vpack.c.b16 %v867, %v866
          %v879 = vpack.c.b16 %v869, %v868
          %v880 = vpack.c.b16 %v871, %v870
          %v881 = vpack.c.b16 %v873, %v872
          %890 = vmatprep.subr.bf16.mxu0 0
          %891 = vmatpush1.bf16.msra.mxu0 %v881
          %892 = vmatprep.subr.bf16.mxu0 0
          %893 = vmatpush1.bf16.msra.mxu0 %v880
          %894 = vmatprep.subr.bf16.mxu0 0
          %895 = vmatpush1.bf16.msra.mxu0 %v879
          %896 = vmatprep.subr.bf16.mxu0 0
          %897 = vmatpush1.bf16.msra.mxu0 %v878
          %898 = vmatprep.subr.bf16.mxu0 0
          %899 = vmatpush1.bf16.msra.mxu0 %v877
          %900 = vmatprep.subr.bf16.mxu0 0
          %901 = vmatpush1.bf16.msra.mxu0 %v876
          %902 = vmatprep.subr.bf16.mxu0 0
          %903 = vmatpush1.bf16.msra.mxu0 %v875
          %904 = vmatprep.subr.bf16.mxu0 0
          %905 = vmatpush1.bf16.msra.mxu0 %v874
          %906 = vmatprep.subr.bf16.mxu0 0
          %907 = vmatpush2.bf16.msra.mxu0 0
          %908 = vmatprep.subr.bf16.mxu0 0
          %909 = vmatpush2.bf16.msra.mxu0 0
          %910 = vmatprep.subr.bf16.mxu0 0
          %911 = vmatpush2.bf16.msra.mxu0 0
          %912 = vmatprep.subr.bf16.mxu0 0
          %913 = vmatpush2.bf16.msra.mxu0 0
          %914 = vmatprep.subr.bf16.mxu0 0
          %915 = vmatpush2.bf16.msra.mxu0 0
          %916 = vmatprep.subr.bf16.mxu0 0
          %917 = vmatpush2.bf16.msra.mxu0 0
          %918 = vmatprep.subr.bf16.mxu0 0
          %919 = vmatpush2.bf16.msra.mxu0 0
          %920 = vmatprep.subr.bf16.mxu0 0
          %921 = vmatpush2.bf16.msra.mxu0 0
          %922 = vmatprep.mubr.bf16.mxu0 0
          %923 = vmatmul.mubr.bf16.gmra.mxu0 %v825
          %v924 = vpop.f32.mrf.mxu0
          %v925 = vadd.f32 0.0, %v924
          %v926 = vpop.f32.mrf.mxu0
          %v927 = vpop.f32.mrf.mxu0
          %v928 = vadd.f32 0.0, %v927
          %v929 = vpop.f32.mrf.mxu0
          %930 = vdwg.mxu0
          %v931 = vadd.f32 %v823, %v925
          %v932 = vadd.f32 %v824, %v928
          %933 = vst [vmem:[#allocation12] sm:$0xff] %v931
          %934 = vst [vmem:[#allocation12 + $0x8] sm:$0xff] %v932
        $region84: #{tpu_custom_call.1} parent=47 // pred_fallthru
          _
        // Predicated region
        $region85: #{tpu_custom_call.1} parent=47 // pred_check
          %p935 = pneg %p270
        $region86: #{tpu_custom_call.1} parent=47 // pred_check_branch
          %937 = sbr.rel (%p935) target = $region88
        $region87: #{tpu_custom_call.1} parent=47 // pred_region
          %s938 = smul.u32 2, %s32
          %s940 = ssub.s32 256, 256
          %941 = vsyncadd [#allocation6], %s940
          %s942 = smul.addr %s938, 128
          %s943 = scalar_lea.hbm %s7, %s942
          %s944 = sshll.u32 [#allocation12], 4
          %s945 = int_to_ptr.vmem [resolvable:$true] %s944
          %950 = dma.vmem_to_hbm [thread:$0]  %s945, 256, %s943, [#allocation6], 128, 128, 8
        $region88: #{tpu_custom_call.1} parent=47 // pred_fallthru
          _
        // Predicated region
        $region89: #{tpu_custom_call.1} parent=47 // pred_check
          %p951 = pneg %p270
        $region90: #{tpu_custom_call.1} parent=47 // pred_check_branch
          %953 = sbr.rel (%p951) target = $region92
        $region91: #{tpu_custom_call.1} parent=47 // pred_region
          %954 = dma.done [#allocation6], 256
        $region92: #{tpu_custom_call.1} parent=47 // pred_fallthru
          _
      $region48: #{tpu_custom_call.1} parent=5 // pred_fallthru
        _
      %p955 = scmp.le.s32.totalorder 2, %s23
      // Predicated region
      $region93: #{tpu_custom_call.1} parent=5 // pred_check
        %p956 = pneg %p955
      $region94: #{tpu_custom_call.1} parent=5 // pred_check_branch
        %958 = sbr.rel (%p956) target = $region96
      $region95: #{tpu_custom_call.1} parent=5 // pred_region
        %s959 = ssub.s32 %s23, 2
      $region96: #{tpu_custom_call.1} parent=5 // pred_fallthru
        _
    $region6: #{tpu_custom_call.1} parent=1 // loop_footer
      %s27 = sadd.s32 1, %s23
    $region7: #{tpu_custom_call.1} parent=1 // loop_footer_branch
      %22 = sbr.rel target = $region3
    $region8: #{tpu_custom_call.1} parent=1 // loop_exit
      _
    %960 = vsyncpa [#allocation5], 1
    %s961 = scalar_lea.sflag [#allocation5], 1
    %962 = vsyncpa %s961, 1
    %963 = vsyncpa [#allocation8], 1
    %s964 = scalar_lea.sflag [#allocation8], 1
    %965 = vsyncpa %s964, 1
    %966 = vsyncpa [#allocation11], 1
    %s967 = scalar_lea.sflag [#allocation11], 1
    %968 = vsyncpa %s967, 1
    %969 = vsyncpa [#allocation6], 1
    %s970 = scalar_lea.sflag [#allocation6], 1
    %971 = vsyncpa %s970, 1

</llo_original>
